<compile_context>
chip_gen: v6e
topology: v6e:2x2x1
jax: 0.10.0
libtpu: 0.0.40
codegen_flags: <defaults>
</compile_context>

<pallas_src>
import jax
import jax.numpy as jnp
from jax.experimental import pallas as pl
from jax.experimental.pallas import tpu as pltpu


def _ratio_lookup_kernel(packed_ref, out_ref):
    # packed_ref : SMEM (C + B,) int32
    #                [0, C)     -- ratio table entries as f32 bit patterns
    #                [C, C + B) -- target class indices (pre-wrapped, clamped)
    # out_ref    : SMEM (B,)    int32 -- gathered f32 bit patterns
    b_total = out_ref.shape[0]
    c = packed_ref.shape[0] - b_total

    # Static unroll over the (small) batch: B independent scalar SMEM
    # load/load/store triples -- pure scalar-slot work, no vregs involved.
    for b in range(b_total):
        idx = packed_ref[c + b]          # dynamic scalar SMEM load (index)
        out_ref[b] = packed_ref[idx]     # dynamic scalar SMEM load + store


def true_ratio_model_forward(data, targets, ratio_target_lookup):
    """Pallas equivalent of TrueRatioModel.forward(data, targets)."""
    del data  # only used for device placement in the torch module
    C = ratio_target_lookup.shape[0]
    B = targets.shape[0]

    # Table as raw int32 bit patterns so table + targets share one SMEM buffer
    # (one HBM->SMEM DMA instead of two).
    table_bits = jax.lax.bitcast_convert_type(
        ratio_target_lookup.astype(jnp.float32), jnp.int32)          # (C,)

    tgt = targets.astype(jnp.int32)                                   # (B,)
    tgt = jnp.where(tgt < 0, tgt + C, tgt)   # torch-style negative wrap
    tgt = jnp.clip(tgt, 0, C - 1)            # guard unchecked SMEM OOB reads
    packed = jnp.concatenate([table_bits, tgt])                       # (C+B,)

    out_bits = pl.pallas_call(
        _ratio_lookup_kernel,
        out_shape=jax.ShapeDtypeStruct((B,), jnp.int32),
        in_specs=[pl.BlockSpec(memory_space=pltpu.MemorySpace.SMEM)],
        out_specs=pl.BlockSpec(memory_space=pltpu.MemorySpace.SMEM),
        cost_estimate=pl.CostEstimate(
            flops=B, transcendentals=0, bytes_accessed=4 * (C + 2 * B)),
    )(packed)

    return jax.lax.bitcast_convert_type(out_bits, jnp.float32)        # (B,)


if __name__ == "__main__":
    key = jax.random.PRNGKey(0)
    k_data, k_table, k_tgt = jax.random.split(key, 3)

    B = 8              # batch of examples / targets
    C_IMG, H, W = 4, 16, 16
    NUM_CLASSES = 16

    # Deterministic synthetic parameters / inputs (no checkpoint loading).
    ratio_target_lookup = jax.random.uniform(
        k_table, (NUM_CLASSES,), dtype=jnp.float32, minval=0.1, maxval=2.0)
    data = jax.random.normal(k_data, (B, C_IMG, H, W), dtype=jnp.float32)
    targets = jax.random.randint(k_tgt, (B,), 0, NUM_CLASSES, dtype=jnp.int32)

    out = true_ratio_model_forward(data, targets, ratio_target_lookup)
    out = jax.block_until_ready(out)

    # Reference check (plain JAX gather) — mirrors ratio_target_lookup[targets].
    ref = ratio_target_lookup[targets]
    assert out.shape == ref.shape, (out.shape, ref.shape)
    assert jnp.allclose(out, ref, atol=1e-6, rtol=1e-6), (out, ref)

    print("KERNEL_OK")
</pallas_src>

<mosaic_0001>
module attributes {stable_mosaic.version = 11 : i64} {
  func.func @_ratio_lookup_kernel(%arg0: memref<24xi32, #tpu.memory_space<smem>>, %arg1: memref<8xi32, #tpu.memory_space<smem>>) attributes {dimension_semantics = [], scalar_prefetch = 0 : i64, scratch_operands = 0 : i64, tpu.core_type = #tpu.core_type<tc>} {
    %c16 = arith.constant 16 : index
    %0 = memref.load %arg0[%c16] : memref<24xi32, #tpu.memory_space<smem>>
    %1 = arith.index_cast %0 : i32 to index
    %2 = memref.load %arg0[%1] : memref<24xi32, #tpu.memory_space<smem>>
    %c0 = arith.constant 0 : index
    %3 = memref.load %arg1[%c0] : memref<8xi32, #tpu.memory_space<smem>>
    memref.store %2, %arg1[%c0] : memref<8xi32, #tpu.memory_space<smem>>
    %c17 = arith.constant 17 : index
    %4 = memref.load %arg0[%c17] : memref<24xi32, #tpu.memory_space<smem>>
    %5 = arith.index_cast %4 : i32 to index
    %6 = memref.load %arg0[%5] : memref<24xi32, #tpu.memory_space<smem>>
    %c1 = arith.constant 1 : index
    %7 = memref.load %arg1[%c1] : memref<8xi32, #tpu.memory_space<smem>>
    memref.store %6, %arg1[%c1] : memref<8xi32, #tpu.memory_space<smem>>
    %c18 = arith.constant 18 : index
    %8 = memref.load %arg0[%c18] : memref<24xi32, #tpu.memory_space<smem>>
    %9 = arith.index_cast %8 : i32 to index
    %10 = memref.load %arg0[%9] : memref<24xi32, #tpu.memory_space<smem>>
    %c2 = arith.constant 2 : index
    %11 = memref.load %arg1[%c2] : memref<8xi32, #tpu.memory_space<smem>>
    memref.store %10, %arg1[%c2] : memref<8xi32, #tpu.memory_space<smem>>
    %c19 = arith.constant 19 : index
    %12 = memref.load %arg0[%c19] : memref<24xi32, #tpu.memory_space<smem>>
    %13 = arith.index_cast %12 : i32 to index
    %14 = memref.load %arg0[%13] : memref<24xi32, #tpu.memory_space<smem>>
    %c3 = arith.constant 3 : index
    %15 = memref.load %arg1[%c3] : memref<8xi32, #tpu.memory_space<smem>>
    memref.store %14, %arg1[%c3] : memref<8xi32, #tpu.memory_space<smem>>
    %c20 = arith.constant 20 : index
    %16 = memref.load %arg0[%c20] : memref<24xi32, #tpu.memory_space<smem>>
    %17 = arith.index_cast %16 : i32 to index
    %18 = memref.load %arg0[%17] : memref<24xi32, #tpu.memory_space<smem>>
    %c4 = arith.constant 4 : index
    %19 = memref.load %arg1[%c4] : memref<8xi32, #tpu.memory_space<smem>>
    memref.store %18, %arg1[%c4] : memref<8xi32, #tpu.memory_space<smem>>
    %c21 = arith.constant 21 : index
    %20 = memref.load %arg0[%c21] : memref<24xi32, #tpu.memory_space<smem>>
    %21 = arith.index_cast %20 : i32 to index
    %22 = memref.load %arg0[%21] : memref<24xi32, #tpu.memory_space<smem>>
    %c5 = arith.constant 5 : index
    %23 = memref.load %arg1[%c5] : memref<8xi32, #tpu.memory_space<smem>>
    memref.store %22, %arg1[%c5] : memref<8xi32, #tpu.memory_space<smem>>
    %c22 = arith.constant 22 : index
    %24 = memref.load %arg0[%c22] : memref<24xi32, #tpu.memory_space<smem>>
    %25 = arith.index_cast %24 : i32 to index
    %26 = memref.load %arg0[%25] : memref<24xi32, #tpu.memory_space<smem>>
    %c6 = arith.constant 6 : index
    %27 = memref.load %arg1[%c6] : memref<8xi32, #tpu.memory_space<smem>>
    memref.store %26, %arg1[%c6] : memref<8xi32, #tpu.memory_space<smem>>
    %c23 = arith.constant 23 : index
    %28 = memref.load %arg0[%c23] : memref<24xi32, #tpu.memory_space<smem>>
    %29 = arith.index_cast %28 : i32 to index
    %30 = memref.load %arg0[%29] : memref<24xi32, #tpu.memory_space<smem>>
    %c7 = arith.constant 7 : index
    %31 = memref.load %arg1[%c7] : memref<8xi32, #tpu.memory_space<smem>>
    memref.store %30, %arg1[%c7] : memref<8xi32, #tpu.memory_space<smem>>
    return
  }
}

</mosaic_0001>

<llo_original>
// kernel: tpu_custom_call.1
$region0: #{tpu_custom_call.1}
  #allocation0 [shape = 'u32[]', space=smem, size = 0x4, offset = 0x4, fixed_abs, tag = 'smem constant byte address 0x4 - core index']
  #allocation1 [shape = 'u32[144,128]{1,0:T(1,128)}', space=vmem, size = 0x12000, scoped, tag = 'internal scratch']
  %s0 = inlined_call_operand.hbm [shape: s32[24], index: 0, kind: input, shape index: {}]
  %s1 = inlined_call_operand.hbm [shape: s32[8], index: 1, kind: output, shape index: {}]
  %s2 = sld [smem:[#allocation0]]
  $region18: #{tpu_custom_call.1} parent=0
    _
  %s4 = ssub.s32 1, %s2
  %s5 = scalar_select 0, %s4, %s2
  $region1: #{tpu_custom_call.1} parent=0
    #allocation2 [shape = 'u8[512]{0}', space=smem, size = 0x200, scoped, tag = 'input window, operand 0, single buffered']
    #allocation3 [shape = 's32[1]{0}', space=sflag, size = 0x4, scoped, tag = 'scoped memory for tpu_custom_call.1']
    #allocation4 [shape = 's32[1]{0}', space=sflag, size = 0x4, scoped, tag = 'scoped memory for tpu_custom_call.1']
    #allocation5 [shape = 'u8[512]{0}', space=smem, size = 0x200, scoped, tag = 'output window, operand 0, single buffered']
    %6 = vsyncpa [#allocation3], 0
    %7 = vsyncpa [#allocation4], 0
    // Predicated region
    $region2: #{tpu_custom_call.1} parent=1 // pred_check
      _
    $region3: #{tpu_custom_call.1} parent=1 // pred_check_branch
      %9 = sbr.rel (0) target = $region5
    $region4: #{tpu_custom_call.1} parent=1 // pred_region
      %s11 = ssub.s32 16, 16
      %12 = vsyncadd [#allocation3], %s11
      %15 = dma.hbm_to_smem %s0, 16, [#allocation2], [#allocation3]
    $region5: #{tpu_custom_call.1} parent=1 // pred_fallthru
      _
    // Predicated region
    $region6: #{tpu_custom_call.1} parent=1 // pred_check
      _
    $region7: #{tpu_custom_call.1} parent=1 // pred_check_branch
      %17 = sbr.rel (0) target = $region9
    $region8: #{tpu_custom_call.1} parent=1 // pred_region
      %18 = dma.done [#allocation3], 16
    $region9: #{tpu_custom_call.1} parent=1 // pred_fallthru
      _
    %19 = sfence
    %s20 = sld [smem:[#allocation2 + $0x10]]
    %s21 = sld [smem:[#allocation2 + %s20]]
    %s22 = scalar_lea.smem [#allocation5], 0
    %23 = sst [smem:[%s22]] %s21
    %s24 = sld [smem:[#allocation2 + $0x11]]
    %s25 = sld [smem:[#allocation2 + %s24]]
    %s26 = scalar_lea.smem [#allocation5], 1
    %27 = sst [smem:[%s26]] %s25
    %s28 = sld [smem:[#allocation2 + $0x12]]
    %s29 = sld [smem:[#allocation2 + %s28]]
    %s30 = scalar_lea.smem [#allocation5], 2
    %31 = sst [smem:[%s30]] %s29
    %s32 = sld [smem:[#allocation2 + $0x13]]
    %s33 = sld [smem:[#allocation2 + %s32]]
    %s34 = scalar_lea.smem [#allocation5], 3
    %35 = sst [smem:[%s34]] %s33
    %s36 = sld [smem:[#allocation2 + $0x14]]
    %s37 = sld [smem:[#allocation2 + %s36]]
    %s38 = scalar_lea.smem [#allocation5], 4
    %39 = sst [smem:[%s38]] %s37
    %s40 = sld [smem:[#allocation2 + $0x15]]
    %s41 = sld [smem:[#allocation2 + %s40]]
    %s42 = scalar_lea.smem [#allocation5], 5
    %43 = sst [smem:[%s42]] %s41
    %s44 = sld [smem:[#allocation2 + $0x16]]
    %s45 = sld [smem:[#allocation2 + %s44]]
    %s46 = scalar_lea.smem [#allocation5], 6
    %47 = sst [smem:[%s46]] %s45
    %s48 = sld [smem:[#allocation2 + $0x17]]
    %s49 = sld [smem:[#allocation2 + %s48]]
    %s50 = scalar_lea.smem [#allocation5], 7
    %51 = sst [smem:[%s50]] %s49
    // Predicated region
    $region10: #{tpu_custom_call.1} parent=1 // pred_check
      _
    $region11: #{tpu_custom_call.1} parent=1 // pred_check_branch
      %53 = sbr.rel (0) target = $region13
    $region12: #{tpu_custom_call.1} parent=1 // pred_region
      %s55 = ssub.s32 16, 16
      %56 = vsyncadd [#allocation4], %s55
      %59 = dma.smem_to_hbm [#allocation5], 16, %s1, [#allocation4]
    $region13: #{tpu_custom_call.1} parent=1 // pred_fallthru
      _
    // Predicated region
    $region14: #{tpu_custom_call.1} parent=1 // pred_check
      _
    $region15: #{tpu_custom_call.1} parent=1 // pred_check_branch
      %61 = sbr.rel (0) target = $region17
    $region16: #{tpu_custom_call.1} parent=1 // pred_region
      %62 = dma.done [#allocation4], 16
    $region17: #{tpu_custom_call.1} parent=1 // pred_fallthru
      _
    %63 = sfence
    %64 = vsyncpa [#allocation3], 1
    %65 = vsyncpa [#allocation4], 1

</llo_original>
